<compile_context>
chip_gen: v7x
topology: tpu7x:2x2x1
jax: 0.10.0
libtpu: 0.0.40
codegen_flags: <defaults>
</compile_context>

<pallas_src>
import functools

import jax
import jax.numpy as jnp
from jax.experimental import pallas as pl
from jax.experimental.pallas import tpu as pltpu


def _mixup_ce_partial_kernel(logits_ref, target_ref, out_ref,
                             m_acc, s_acc, g0_acc, g1_acc,
                             *, n_total: int, c_total: int):
    """Per (row-tile, class-tile) step of the mixup cross-entropy partial sums.

    logits_ref: (TN, TC)  model outputs (native dtype), class dim on lanes.
    target_ref: (TN, 3)   float32 [class0, class1, lambda] rows (lambda unused here).
    out_ref:    (1, 1, 128) float32; lanes 0/1/2 = sum(lse), sum(logits@t0), sum(logits@t1).
    m_acc/s_acc/g0_acc/g1_acc: (TN, 1) f32 VMEM scratch (online-softmax + gather accums).
    """
    i = pl.program_id(0)          # row-tile index
    j = pl.program_id(1)          # class-tile index (reduction axis, innermost)
    nj = pl.num_programs(1)
    tn, tc = logits_ref.shape

    @pl.when(j == 0)
    def _():
        m_acc[...] = jnp.full_like(m_acc, -jnp.inf)
        s_acc[...] = jnp.zeros_like(s_acc)
        g0_acc[...] = jnp.zeros_like(g0_acc)
        g1_acc[...] = jnp.zeros_like(g1_acc)

    x = logits_ref[...].astype(jnp.float32)                      # (TN, TC) promote in-kernel

    t0 = target_ref[:, 0:1].astype(jnp.int32)                    # (TN, 1)
    t1 = target_ref[:, 1:2].astype(jnp.int32)                    # (TN, 1)

    # Global class index of each lane in this class tile.
    col = j * tc + jax.lax.broadcasted_iota(jnp.int32, (tn, tc), 1)

    # Mask padded class columns (only exists when C % TC != 0 — compile-time decision).
    if c_total % tc != 0:
        xm_src = jnp.where(col < c_total, x, -jnp.inf)
    else:
        xm_src = x

    # Online log-sum-exp accumulation across class tiles.
    m_prev = m_acc[...]
    m_new = jnp.maximum(m_prev, jnp.max(xm_src, axis=-1, keepdims=True))
    s_acc[...] = (s_acc[...] * jnp.exp(m_prev - m_new)
                  + jnp.sum(jnp.exp(xm_src - m_new), axis=-1, keepdims=True))
    m_acc[...] = m_new

    # One-hot gathers of the raw logits at the two target classes.  Each valid class
    # index lands in exactly one class tile, so plain accumulation is exact; padded
    # columns have col >= C and never match.
    g0_acc[...] += jnp.sum(jnp.where(col == t0, x, 0.0), axis=-1, keepdims=True)
    g1_acc[...] += jnp.sum(jnp.where(col == t1, x, 0.0), axis=-1, keepdims=True)

    @pl.when(j == nj - 1)
    def _():
        lse = jnp.log(s_acc[...]) + m_acc[...]                   # (TN, 1)
        # Mask rows beyond N (last partial row tile reads unspecified padding).
        ridx = i * tn + jax.lax.broadcasted_iota(jnp.int32, (tn, 1), 0)
        valid = ridx < n_total
        part_lse = jnp.sum(jnp.where(valid, lse, 0.0))
        part_g0 = jnp.sum(jnp.where(valid, g0_acc[...], 0.0))
        part_g1 = jnp.sum(jnp.where(valid, g1_acc[...], 0.0))
        lane = jax.lax.broadcasted_iota(jnp.int32, out_ref.shape, 2)
        out_ref[...] = jnp.where(
            lane == 0, part_lse,
            jnp.where(lane == 1, part_g0,
                      jnp.where(lane == 2, part_g1, 0.0))).astype(jnp.float32)


def _vmem_budgets():
    """Per-generation (data-block budget, scoped-vmem limit) in bytes."""
    try:
        vmem_cap = int(pltpu.get_tpu_info().vmem_capacity_bytes)
    except Exception:
        vmem_cap = 64 * 1024 * 1024  # most conservative (v7x physical VMEM)
    # Budget for double-buffered input blocks + f32 intermediates.
    budget = min(vmem_cap // 2, 48 * 1024 * 1024)        # v5e/v6e: 48 MiB, v7x: 32 MiB
    # Explicit scoped-VMEM limit handed to Mosaic, with headroom for outputs,
    # target blocks, scratch, and internal compiler scratch.
    vmem_limit = min((vmem_cap * 3) // 4, 96 * 1024 * 1024)  # v5e/v6e: 96 MiB, v7x: 48 MiB
    return budget, int(vmem_limit)


def mixup_softmax_loss(logits: jax.Array, target: jax.Array,
                       *, block_rows=None, block_cols=None) -> jax.Array:
    """logits: (N, C) any float dtype; target: (N, 3) [cls0, cls1, lambda]. Returns scalar f32."""
    n, c = logits.shape
    assert target.ndim == 2 and target.shape == (n, 3), "expect (N, 3) mixup target"
    assert c < (1 << 24), "class ids are carried as float32; need C < 2^24"

    tgt = target.astype(jnp.float32)
    itemsize = jnp.dtype(logits.dtype).itemsize

    budget, vmem_limit = _vmem_budgets()
    # Per-element footprint: double-buffered native-dtype input block + ~3 full-width
    # f32 in-kernel temporaries (promoted tile, exp, iota/compare chains).
    per_elem = 2 * itemsize + 12

    # --- class-tile size ---
    if block_cols is not None:
        tc = int(block_cols)
        assert tc == c or (tc % 128 == 0 and tc <= c)
    elif 8 * c * per_elem <= budget:
        tc = c                                            # all classes in one block
    else:
        tc = max(128, (min(budget // (8 * per_elem), c) // 128) * 128)

    # --- row-tile size ---
    rows_budget = max(8, budget // (tc * per_elem))       # >= 8 by construction of tc
    if block_rows is not None:
        tn = int(block_rows)
        assert tn == n or tn % 8 == 0
    else:
        tn = min(n, rows_budget, 2048)
        if tn < n:
            tn = max(8, (tn // 8) * 8)                    # sublane-aligned tiles
        if tn >= n and n > 8:
            # Guarantee >= 2 row tiles so both TensorCores get work on v7x megacore
            # (one extra ~0.35us grid step elsewhere — negligible).
            tn = max(8, ((pl.cdiv(n, 2) + 7) // 8) * 8)
            if tn >= n:
                tn = n

    num_row_tiles = pl.cdiv(n, tn)
    num_c_tiles = pl.cdiv(c, tc)

    partials = pl.pallas_call(
        functools.partial(_mixup_ce_partial_kernel, n_total=n, c_total=c),
        out_shape=jax.ShapeDtypeStruct((num_row_tiles, 1, 128), jnp.float32),
        grid=(num_row_tiles, num_c_tiles),
        in_specs=[
            pl.BlockSpec((tn, tc), lambda i, j: (i, j)),   # logits tile (native dtype)
            pl.BlockSpec((tn, 3), lambda i, j: (i, 0)),    # raw target rows
        ],
        out_specs=pl.BlockSpec((1, 1, 128), lambda i, j: (i, 0, 0)),
        scratch_shapes=[pltpu.VMEM((tn, 1), jnp.float32)] * 4,
        compiler_params=pltpu.CompilerParams(
            dimension_semantics=("parallel", "arbitrary"),
            vmem_limit_bytes=vmem_limit,
        ),
    )(logits, tgt)

    sum_lse = jnp.sum(partials[:, 0, 0])
    sum_g0 = jnp.sum(partials[:, 0, 1])
    sum_g1 = jnp.sum(partials[:, 0, 2])
    mean_lam = jnp.mean(tgt[:, 2])                          # computed in parallel with the kernel
    loss1 = (sum_lse - sum_g0) / n                          # mean CE vs target[:, 0]
    loss2 = (sum_lse - sum_g1) / n                          # mean CE vs target[:, 1]
    return loss1 * mean_lam + loss2 * (1.0 - mean_lam)


def _reference(logits, target):
    # plain-JAX reference of the same default-config forward
    logp = jax.nn.log_softmax(logits.astype(jnp.float32), axis=-1)
    t0 = target[:, 0].astype(jnp.int32)
    t1 = target[:, 1].astype(jnp.int32)
    lam = target[:, 2].astype(jnp.float32)
    ce1 = -jnp.take_along_axis(logp, t0[:, None], axis=-1)[:, 0]
    ce2 = -jnp.take_along_axis(logp, t1[:, None], axis=-1)[:, 0]
    loss1 = ce1.mean()
    loss2 = ce2.mean()
    return (loss1 * lam + loss2 * (1.0 - lam)).mean()


if __name__ == "__main__":
    keys = jax.random.split(jax.random.PRNGKey(0), 8)

    # Primary small-shape check (single row tile, single class tile).
    N, C = 8, 32
    logits = jax.random.normal(keys[0], (N, C), dtype=jnp.float32)
    cls0 = jax.random.randint(keys[1], (N,), 0, C)
    cls1 = jax.random.randint(keys[2], (N,), 0, C)
    lam = jax.random.uniform(keys[3], (N,), dtype=jnp.float32)
    target = jnp.stack(
        [cls0.astype(jnp.float32), cls1.astype(jnp.float32), lam], axis=1
    )  # (N, 3)

    out = jax.block_until_ready(mixup_softmax_loss(logits, target))
    ref = _reference(logits, target)
    assert jnp.allclose(out, ref, atol=1e-5, rtol=1e-5), (out, ref)

    # Secondary check: exercise the tiled (row x class) grid incl. padded last tiles.
    N2, C2 = 20, 200
    logits2 = jax.random.normal(keys[4], (N2, C2), dtype=jnp.float32)
    target2 = jnp.stack(
        [jax.random.randint(keys[5], (N2,), 0, C2).astype(jnp.float32),
         jax.random.randint(keys[6], (N2,), 0, C2).astype(jnp.float32),
         jax.random.uniform(keys[7], (N2,), dtype=jnp.float32)], axis=1)
    out2 = jax.block_until_ready(
        mixup_softmax_loss(logits2, target2, block_rows=8, block_cols=128))
    ref2 = _reference(logits2, target2)
    assert jnp.allclose(out2, ref2, atol=1e-5, rtol=1e-5), (out2, ref2)

    print("KERNEL_OK")
</pallas_src>

<mosaic_0001>
module attributes {stable_mosaic.version = 11 : i64} {
  func.func @_mixup_ce_partial_kernel(%arg0: i32, %arg1: i32, %arg2: memref<8x32xf32, #tpu.memory_space<vmem>>, %arg3: memref<8x3xf32, #tpu.memory_space<vmem>>, %arg4: memref<1x1x128xf32, #tpu.memory_space<vmem>>, %arg5: memref<8x1xf32, #tpu.memory_space<vmem>>, %arg6: memref<8x1xf32, #tpu.memory_space<vmem>>, %arg7: memref<8x1xf32, #tpu.memory_space<vmem>>, %arg8: memref<8x1xf32, #tpu.memory_space<vmem>>) attributes {dimension_semantics = [#tpu.dimension_semantics<parallel>, #tpu.dimension_semantics<arbitrary>], iteration_bounds = array<i64: 1, 1>, scalar_prefetch = 0 : i64, scratch_operands = 4 : i64, tpu.core_type = #tpu.core_type<tc>, window_params = [{transform_indices = @transform_0, window_bounds = array<i64: 8, 32>}, {transform_indices = @transform_1, window_bounds = array<i64: 8, 3>}, {transform_indices = @transform_2, window_bounds = array<i64: 1, 1, 128>}]} {
    %c0_i32 = arith.constant 0 : i32
    %0 = arith.cmpi eq, %arg1, %c0_i32 : i32
    %1 = arith.extui %0 : i1 to i32
    %c0_i32_0 = arith.constant 0 : i32
    %2 = arith.cmpi ne, %1, %c0_i32_0 : i32
    scf.if %2 {
      %cst_28 = arith.constant 0xFF800000 : f32
      %49 = vector.broadcast %cst_28 : f32 to vector<8x1xf32>
      %c0_29 = arith.constant 0 : index
      %c0_30 = arith.constant 0 : index
      %50 = vector.load %arg5[%c0_29, %c0_30] : memref<8x1xf32, #tpu.memory_space<vmem>>, vector<8x1xf32>
      tpu.vector_store %arg5[%c0_29, %c0_30], %49 {strides = array<i32>} : memref<8x1xf32, #tpu.memory_space<vmem>>, vector<8x1xf32>,
      %cst_31 = arith.constant 0.000000e+00 : f32
      %51 = vector.broadcast %cst_31 : f32 to vector<8x1xf32>
      %c0_32 = arith.constant 0 : index
      %c0_33 = arith.constant 0 : index
      %52 = vector.load %arg6[%c0_32, %c0_33] : memref<8x1xf32, #tpu.memory_space<vmem>>, vector<8x1xf32>
      tpu.vector_store %arg6[%c0_32, %c0_33], %51 {strides = array<i32>} : memref<8x1xf32, #tpu.memory_space<vmem>>, vector<8x1xf32>,
      %cst_34 = arith.constant 0.000000e+00 : f32
      %53 = vector.broadcast %cst_34 : f32 to vector<8x1xf32>
      %c0_35 = arith.constant 0 : index
      %c0_36 = arith.constant 0 : index
      %54 = vector.load %arg7[%c0_35, %c0_36] : memref<8x1xf32, #tpu.memory_space<vmem>>, vector<8x1xf32>
      tpu.vector_store %arg7[%c0_35, %c0_36], %53 {strides = array<i32>} : memref<8x1xf32, #tpu.memory_space<vmem>>, vector<8x1xf32>,
      %cst_37 = arith.constant 0.000000e+00 : f32
      %55 = vector.broadcast %cst_37 : f32 to vector<8x1xf32>
      %c0_38 = arith.constant 0 : index
      %c0_39 = arith.constant 0 : index
      %56 = vector.load %arg8[%c0_38, %c0_39] : memref<8x1xf32, #tpu.memory_space<vmem>>, vector<8x1xf32>
      tpu.vector_store %arg8[%c0_38, %c0_39], %55 {strides = array<i32>} : memref<8x1xf32, #tpu.memory_space<vmem>>, vector<8x1xf32>,
    } else {
    }
    %c0 = arith.constant 0 : index
    %c0_1 = arith.constant 0 : index
    %3 = vector.load %arg2[%c0, %c0_1] : memref<8x32xf32, #tpu.memory_space<vmem>>, vector<8x32xf32>
    %c0_2 = arith.constant 0 : index
    %c0_3 = arith.constant 0 : index
    %4 = vector.load %arg3[%c0_2, %c0_3] : memref<8x3xf32, #tpu.memory_space<vmem>>, vector<8x1xf32>
    %5 = arith.fptosi %4 : vector<8x1xf32> to vector<8x1xi32>
    %c0_4 = arith.constant 0 : index
    %c1 = arith.constant 1 : index
    %6 = vector.load %arg3[%c0_4, %c1] : memref<8x3xf32, #tpu.memory_space<vmem>>, vector<8x1xf32>
    %7 = arith.fptosi %6 : vector<8x1xf32> to vector<8x1xi32>
    %c32_i32 = arith.constant 32 : i32
    %8 = arith.muli %arg1, %c32_i32 : i32
    %9 = tpu.iota {dimensions = array<i32: 1>} : vector<8x32xi32>
    %10 = vector.broadcast %8 : i32 to vector<8x32xi32>
    %11 = arith.addi %10, %9 : vector<8x32xi32>
    %c0_5 = arith.constant 0 : index
    %c0_6 = arith.constant 0 : index
    %12 = vector.load %arg5[%c0_5, %c0_6] : memref<8x1xf32, #tpu.memory_space<vmem>>, vector<8x1xf32>
    %cst = arith.constant dense<0xFF800000> : vector<8xf32>
    %13 = vector.multi_reduction <maximumf>, %3, %cst [1] : vector<8x32xf32> to vector<8xf32>
    %14 = vector.shape_cast %13 : vector<8xf32> to vector<8x1xf32>
    %15 = arith.maximumf %12, %14 : vector<8x1xf32>
    %c0_7 = arith.constant 0 : index
    %c0_8 = arith.constant 0 : index
    %16 = vector.load %arg6[%c0_7, %c0_8] : memref<8x1xf32, #tpu.memory_space<vmem>>, vector<8x1xf32>
    %17 = arith.subf %12, %15 : vector<8x1xf32>
    %18 = math.exp %17 : vector<8x1xf32>
    %19 = arith.mulf %16, %18 : vector<8x1xf32>
    %20 = vector.broadcast %15 : vector<8x1xf32> to vector<8x32xf32>
    %21 = arith.subf %3, %20 : vector<8x32xf32>
    %22 = math.exp %21 : vector<8x32xf32>
    %cst_9 = arith.constant dense<0.000000e+00> : vector<8xf32>
    %23 = vector.multi_reduction <add>, %22, %cst_9 [1] : vector<8x32xf32> to vector<8xf32>
    %24 = vector.shape_cast %23 : vector<8xf32> to vector<8x1xf32>
    %25 = arith.addf %19, %24 : vector<8x1xf32>
    %c0_10 = arith.constant 0 : index
    %c0_11 = arith.constant 0 : index
    %26 = vector.load %arg6[%c0_10, %c0_11] : memref<8x1xf32, #tpu.memory_space<vmem>>, vector<8x1xf32>
    tpu.vector_store %arg6[%c0_10, %c0_11], %25 {strides = array<i32>} : memref<8x1xf32, #tpu.memory_space<vmem>>, vector<8x1xf32>,
    %c0_12 = arith.constant 0 : index
    %c0_13 = arith.constant 0 : index
    %27 = vector.load %arg5[%c0_12, %c0_13] : memref<8x1xf32, #tpu.memory_space<vmem>>, vector<8x1xf32>
    tpu.vector_store %arg5[%c0_12, %c0_13], %15 {strides = array<i32>} : memref<8x1xf32, #tpu.memory_space<vmem>>, vector<8x1xf32>,
    %c0_14 = arith.constant 0 : index
    %c0_15 = arith.constant 0 : index
    %28 = vector.load %arg7[%c0_14, %c0_15] : memref<8x1xf32, #tpu.memory_space<vmem>>, vector<8x1xf32>
    %29 = vector.broadcast %5 : vector<8x1xi32> to vector<8x32xi32>
    %30 = arith.cmpi eq, %11, %29 : vector<8x32xi32>
    %cst_16 = arith.constant 0.000000e+00 : f32
    %31 = vector.broadcast %cst_16 : f32 to vector<8x32xf32>
    %32 = arith.select %30, %3, %31 : vector<8x32xi1>, vector<8x32xf32>
    %cst_17 = arith.constant dense<0.000000e+00> : vector<8xf32>
    %33 = vector.multi_reduction <add>, %32, %cst_17 [1] : vector<8x32xf32> to vector<8xf32>
    %34 = vector.shape_cast %33 : vector<8xf32> to vector<8x1xf32>
    %35 = arith.addf %28, %34 : vector<8x1xf32>
    %c0_18 = arith.constant 0 : index
    %c0_19 = arith.constant 0 : index
    %36 = vector.load %arg7[%c0_18, %c0_19] : memref<8x1xf32, #tpu.memory_space<vmem>>, vector<8x1xf32>
    tpu.vector_store %arg7[%c0_18, %c0_19], %35 {strides = array<i32>} : memref<8x1xf32, #tpu.memory_space<vmem>>, vector<8x1xf32>,
    %c0_20 = arith.constant 0 : index
    %c0_21 = arith.constant 0 : index
    %37 = vector.load %arg8[%c0_20, %c0_21] : memref<8x1xf32, #tpu.memory_space<vmem>>, vector<8x1xf32>
    %38 = vector.broadcast %7 : vector<8x1xi32> to vector<8x32xi32>
    %39 = arith.cmpi eq, %11, %38 : vector<8x32xi32>
    %cst_22 = arith.constant 0.000000e+00 : f32
    %40 = vector.broadcast %cst_22 : f32 to vector<8x32xf32>
    %41 = arith.select %39, %3, %40 : vector<8x32xi1>, vector<8x32xf32>
    %cst_23 = arith.constant dense<0.000000e+00> : vector<8xf32>
    %42 = vector.multi_reduction <add>, %41, %cst_23 [1] : vector<8x32xf32> to vector<8xf32>
    %43 = vector.shape_cast %42 : vector<8xf32> to vector<8x1xf32>
    %44 = arith.addf %37, %43 : vector<8x1xf32>
    %c0_24 = arith.constant 0 : index
    %c0_25 = arith.constant 0 : index
    %45 = vector.load %arg8[%c0_24, %c0_25] : memref<8x1xf32, #tpu.memory_space<vmem>>, vector<8x1xf32>
    tpu.vector_store %arg8[%c0_24, %c0_25], %44 {strides = array<i32>} : memref<8x1xf32, #tpu.memory_space<vmem>>, vector<8x1xf32>,
    %c0_i32_26 = arith.constant 0 : i32
    %46 = arith.cmpi eq, %arg1, %c0_i32_26 : i32
    %47 = arith.extui %46 : i1 to i32
    %c0_i32_27 = arith.constant 0 : i32
    %48 = arith.cmpi ne, %47, %c0_i32_27 : i32
    scf.if %48 {
      %c0_28 = arith.constant 0 : index
      %c0_29 = arith.constant 0 : index
      %49 = vector.load %arg6[%c0_28, %c0_29] : memref<8x1xf32, #tpu.memory_space<vmem>>, vector<8x1xf32>
      %50 = math.log %49 : vector<8x1xf32>
      %c0_30 = arith.constant 0 : index
      %c0_31 = arith.constant 0 : index
      %51 = vector.load %arg5[%c0_30, %c0_31] : memref<8x1xf32, #tpu.memory_space<vmem>>, vector<8x1xf32>
      %52 = arith.addf %50, %51 : vector<8x1xf32>
      %c8_i32 = arith.constant 8 : i32
      %53 = arith.muli %arg0, %c8_i32 : i32
      %54 = tpu.iota {dimensions = array<i32: 0>} : vector<8x1xi32>
      %55 = vector.broadcast %53 : i32 to vector<8x1xi32>
      %56 = arith.addi %55, %54 : vector<8x1xi32>
      %c8_i32_32 = arith.constant 8 : i32
      %57 = vector.broadcast %c8_i32_32 : i32 to vector<8x1xi32>
      %58 = arith.cmpi slt, %56, %57 : vector<8x1xi32>
      %cst_33 = arith.constant 0.000000e+00 : f32
      %59 = vector.broadcast %cst_33 : f32 to vector<8x1xf32>
      %60 = arith.select %58, %52, %59 : vector<8x1xi1>, vector<8x1xf32>
      %61 = vector.shape_cast %60 : vector<8x1xf32> to vector<1x8x1xf32>
      %cst_34 = arith.constant dense<0.000000e+00> : vector<1xf32>
      %62 = vector.multi_reduction <add>, %61, %cst_34 [1, 2] : vector<1x8x1xf32> to vector<1xf32>
      %63 = vector.shape_cast %62 : vector<1xf32> to vector<1x1x1xf32>
      %64 = vector.extract %63[0, 0, 0] : f32 from vector<1x1x1xf32>
      %c0_35 = arith.constant 0 : index
      %c0_36 = arith.constant 0 : index
      %65 = vector.load %arg7[%c0_35, %c0_36] : memref<8x1xf32, #tpu.memory_space<vmem>>, vector<8x1xf32>
      %cst_37 = arith.constant 0.000000e+00 : f32
      %66 = vector.broadcast %cst_37 : f32 to vector<8x1xf32>
      %67 = arith.select %58, %65, %66 : vector<8x1xi1>, vector<8x1xf32>
      %68 = vector.shape_cast %67 : vector<8x1xf32> to vector<1x8x1xf32>
      %cst_38 = arith.constant dense<0.000000e+00> : vector<1xf32>
      %69 = vector.multi_reduction <add>, %68, %cst_38 [1, 2] : vector<1x8x1xf32> to vector<1xf32>
      %70 = vector.shape_cast %69 : vector<1xf32> to vector<1x1x1xf32>
      %71 = vector.extract %70[0, 0, 0] : f32 from vector<1x1x1xf32>
      %c0_39 = arith.constant 0 : index
      %c0_40 = arith.constant 0 : index
      %72 = vector.load %arg8[%c0_39, %c0_40] : memref<8x1xf32, #tpu.memory_space<vmem>>, vector<8x1xf32>
      %cst_41 = arith.constant 0.000000e+00 : f32
      %73 = vector.broadcast %cst_41 : f32 to vector<8x1xf32>
      %74 = arith.select %58, %72, %73 : vector<8x1xi1>, vector<8x1xf32>
      %75 = vector.shape_cast %74 : vector<8x1xf32> to vector<1x8x1xf32>
      %cst_42 = arith.constant dense<0.000000e+00> : vector<1xf32>
      %76 = vector.multi_reduction <add>, %75, %cst_42 [1, 2] : vector<1x8x1xf32> to vector<1xf32>
      %77 = vector.shape_cast %76 : vector<1xf32> to vector<1x1x1xf32>
      %78 = vector.extract %77[0, 0, 0] : f32 from vector<1x1x1xf32>
      %79 = tpu.iota {dimensions = array<i32: 2>} : vector<1x1x128xi32>
      %c0_i32_43 = arith.constant 0 : i32
      %80 = vector.broadcast %c0_i32_43 : i32 to vector<1x1x128xi32>
      %81 = arith.cmpi eq, %79, %80 : vector<1x1x128xi32>
      %c1_i32 = arith.constant 1 : i32
      %82 = vector.broadcast %c1_i32 : i32 to vector<1x1x128xi32>
      %83 = arith.cmpi eq, %79, %82 : vector<1x1x128xi32>
      %c2_i32 = arith.constant 2 : i32
      %84 = vector.broadcast %c2_i32 : i32 to vector<1x1x128xi32>
      %85 = arith.cmpi eq, %79, %84 : vector<1x1x128xi32>
      %cst_44 = arith.constant 0.000000e+00 : f32
      %86 = vector.broadcast %78 : f32 to vector<1x1x128xf32>
      %87 = vector.broadcast %cst_44 : f32 to vector<1x1x128xf32>
      %88 = arith.select %85, %86, %87 : vector<1x1x128xi1>, vector<1x1x128xf32>
      %89 = vector.broadcast %71 : f32 to vector<1x1x128xf32>
      %90 = arith.select %83, %89, %88 : vector<1x1x128xi1>, vector<1x1x128xf32>
      %91 = vector.broadcast %64 : f32 to vector<1x1x128xf32>
      %92 = arith.select %81, %91, %90 : vector<1x1x128xi1>, vector<1x1x128xf32>
      %c0_45 = arith.constant 0 : index
      %c0_46 = arith.constant 0 : index
      %c0_47 = arith.constant 0 : index
      %93 = vector.load %arg4[%c0_45, %c0_46, %c0_47] : memref<1x1x128xf32, #tpu.memory_space<vmem>>, vector<1x1x128xf32>
      tpu.vector_store %arg4[%c0_45, %c0_46, %c0_47], %92 {strides = array<i32>} : memref<1x1x128xf32, #tpu.memory_space<vmem>>, vector<1x1x128xf32>,
    } else {
    }
    return
  }
  func.func @transform_0(%arg0: i32, %arg1: i32) -> (i32, i32) {
    %c0_i32 = arith.constant 0 : i32
    return %arg0, %arg1 : i32, i32
  }
  func.func @transform_1(%arg0: i32, %arg1: i32) -> (i32, i32) {
    %c0_i32 = arith.constant 0 : i32
    %c0_i32_0 = arith.constant 0 : i32
    return %arg0, %c0_i32 : i32, i32
  }
  func.func @transform_2(%arg0: i32, %arg1: i32) -> (i32, i32, i32) {
    %c0_i32 = arith.constant 0 : i32
    %c0_i32_0 = arith.constant 0 : i32
    %c0_i32_1 = arith.constant 0 : i32
    return %arg0, %c0_i32, %c0_i32_0 : i32, i32, i32
  }
}

</mosaic_0001>

<llo_original>
// kernel: tpu_custom_call.1
$region0: #{tpu_custom_call.1}
  #allocation0 [shape = 'u32[]', space=smem, size = 0x4, offset = 0x4, fixed_abs, tag = 'smem constant byte address 0x4 - core index']
  #allocation1 [shape = 'u32[144,128]{1,0:T(1,128)}', space=vmem, size = 0x12000, scoped, tag = 'internal scratch']
  #allocation2 [shape = 'f32[8,1]{1,0:T(8,128)}', space=vmem, size = 0x1000, scoped, tag = 'scratch operand']
  #allocation3 [shape = 'f32[8,1]{1,0:T(8,128)}', space=vmem, size = 0x1000, scoped, tag = 'scratch operand']
  #allocation4 [shape = 'f32[8,1]{1,0:T(8,128)}', space=vmem, size = 0x1000, scoped, tag = 'scratch operand']
  #allocation5 [shape = 'f32[8,1]{1,0:T(8,128)}', space=vmem, size = 0x1000, scoped, tag = 'scratch operand']
  %s0 = inlined_call_operand.vmem [shape: f32[8,32], index: 0, kind: input, shape index: {}]
  %s1 = inlined_call_operand.vmem [shape: f32[8,3], index: 1, kind: input, shape index: {}]
  %s2 = inlined_call_operand.hbm [shape: f32[1,1,128], index: 2, kind: output, shape index: {}]
  %s3 = sld [smem:[#allocation0]]
  $region26: #{tpu_custom_call.1} parent=0
    _
  %s5 = ssub.s32 1, %s3
  %s6 = scalar_select 0, %s5, %s3
  $region1: #{tpu_custom_call.1} parent=0
    #allocation6 [shape = 'u8[512]{0}', space=vmem, size = 0x400, scoped, tag = 'output window, operand 0, single buffered']
    #allocation7 [shape = 's32[1]{0}', space=sflag, size = 0x4, scoped, tag = 'scoped memory for tpu_custom_call.1']
    %7 = vsyncpa [#allocation7], 0
    // Predicated region
    $region2: #{tpu_custom_call.1} parent=1 // pred_check
      _
    $region3: #{tpu_custom_call.1} parent=1 // pred_check_branch
      %9 = sbr.rel (0) target = $region5
    $region4: #{tpu_custom_call.1} parent=1 // pred_region
      _
    $region5: #{tpu_custom_call.1} parent=1 // pred_fallthru
      _
    // Predicated region
    $region6: #{tpu_custom_call.1} parent=1 // pred_check
      _
    $region7: #{tpu_custom_call.1} parent=1 // pred_check_branch
      %11 = sbr.rel (0) target = $region9
    $region8: #{tpu_custom_call.1} parent=1 // pred_region
      _
    $region9: #{tpu_custom_call.1} parent=1 // pred_fallthru
      _
    %p12 = scmp.eq.s32.totalorder 0, 0
    // Predicated region
    $region10: #{tpu_custom_call.1} parent=1 // pred_check
      %p13 = pneg %p12
    $region11: #{tpu_custom_call.1} parent=1 // pred_check_branch
      %15 = sbr.rel (%p13) target = $region13
    $region12: #{tpu_custom_call.1} parent=1 // pred_region
      %vm16 = vcmask 7168
      %17 = vst.msk [vmem:[#allocation2] sm:$0xff] %vm16, -inf
      %18 = vst.msk [vmem:[#allocation3] sm:$0xff] %vm16, 0.0
      %19 = vst.msk [vmem:[#allocation4] sm:$0xff] %vm16, 0.0
      %20 = vst.msk [vmem:[#allocation5] sm:$0xff] %vm16, 0.0
    $region13: #{tpu_custom_call.1} parent=1 // pred_fallthru
      _
    %v21 = vld [vmem:[%s0] sm:$0xff]
    %v22 = vld [vmem:[%s1] sm:$0xff]
    %v23 = vcvt.f32.s32.to.zero.pseudo %v22
    %s24 = smul.u32 0, 32
    %v25 = vlaneseq
    %v26 = vand.u32 %v25, 127
    %v27 = vstv %s24
    %v28 = vadd.s32 %v27, %v26
    %v29 = vld [vmem:[#allocation2] sm:$0xff]
    %vm30 = vcmask 261120
    %v31 = vsel %vm30, %v21, -inf
    %32 = vmax.xlane.f32.xlu0 %v31
    %v33 = vpop.xlane.xlu0 %32
    %v34 = vmax.f32 %v29, %v33
    %v35 = vld [vmem:[#allocation3] sm:$0xff]
    %v36 = vsub.f32 %v29, %v34
    %v37 = vmul.f32 %v36, 1.442695
    %v38 = vpow.pop %v37
    %v39 = vmul.f32 %v35, %v38
    %41 = vset.pattern.permute.xlu0 0
    %42 = vperm.xlu0 %41, %v34
    %v43 = vpop.permute.xlu0 %42
    %v45 = vsub.f32 %v21, %v43
    %v46 = vmul.f32 %v45, 1.442695
    %v47 = vpow.pop %v46
    %v48 = vsel %vm30, %v47, 0.0
    %49 = vadd.xlane.f32.xlu0 %v48
    %v50 = vpop.xlane.xlu0 %49
    %v51 = vadd.f32 %v39, %v50
    %vm52 = vcmask 7168
    %53 = vst.msk [vmem:[#allocation3] sm:$0xff] %vm52, %v51
    %54 = vst.msk [vmem:[#allocation2] sm:$0xff] %vm52, %v34
    %v55 = vld [vmem:[#allocation4] sm:$0xff]
    %56 = vset.pattern.permute.xlu0 0
    %57 = vperm.xlu0 %56, %v23
    %v58 = vpop.permute.xlu0 %57
    %vm59 = vcmp.eq.s32.totalorder %v28, %v58
    %v60 = vsel %vm59, %v21, 0.0
    %v61 = vsel %vm30, %v60, 0.0
    %62 = vadd.xlane.f32.xlu0 %v61
    %v63 = vpop.xlane.xlu0 %62
    %v64 = vadd.f32 %v55, %v63
    %65 = vst.msk [vmem:[#allocation4] sm:$0xff] %vm52, %v64
    %v66 = vld [vmem:[#allocation5] sm:$0xff]
    %67 = vset.pattern.permute.xlu0 1
    %68 = vperm.xlu0 %67, %v23
    %v69 = vpop.permute.xlu0 %68
    %vm70 = vcmp.eq.s32.totalorder %v28, %v69
    %v71 = vsel %vm70, %v21, 0.0
    %v72 = vsel %vm30, %v71, 0.0
    %73 = vadd.xlane.f32.xlu0 %v72
    %v74 = vpop.xlane.xlu0 %73
    %v75 = vadd.f32 %v66, %v74
    %76 = vst.msk [vmem:[#allocation5] sm:$0xff] %vm52, %v75
    // Predicated region
    $region14: #{tpu_custom_call.1} parent=1 // pred_check
      %p77 = pneg %p12
    $region15: #{tpu_custom_call.1} parent=1 // pred_check_branch
      %79 = sbr.rel (%p77) target = $region17
    $region16: #{tpu_custom_call.1} parent=1 // pred_region
      %v80 = vld [vmem:[#allocation3] sm:$0xff]
      %v81 = vlog2.pop %v80
      %v82 = vmul.f32 %v81, 0.6931472
      %v83 = vld [vmem:[#allocation2] sm:$0xff]
      %v84 = vadd.f32 %v82, %v83
      %s85 = smul.u32 0, 8
      %v86 = vlaneseq
      %v87 = vshrl.u32 %v86, 7
      %v88 = vstv %s85
      %v89 = vadd.s32 %v88, %v87
      %vm90 = vcmp.lt.s32.totalorder %v89, 8
      %v91 = vsel %vm90, %v84, 0.0
      %v92 = vsel %vm52, %v91, 0.0
      %93 = vadd.xlane.f32.xlu0 %v92
      %v94 = vpop.xlane.xlu0 %93
      %v95 = vrot.slane %v94, 4
      %v96 = vadd.f32 %v94, %v95
      %v97 = vrot.slane %v96, 2
      %v98 = vadd.f32 %v96, %v97
      %v99 = vrot.slane %v98, 1
      %v100 = vadd.f32 %v98, %v99
      %s101 = vtos %v100
      %v102 = vld [vmem:[#allocation4] sm:$0xff]
      %v103 = vsel %vm90, %v102, 0.0
      %v104 = vsel %vm52, %v103, 0.0
      %105 = vadd.xlane.f32.xlu0 %v104
      %v106 = vpop.xlane.xlu0 %105
      %v107 = vrot.slane %v106, 4
      %v108 = vadd.f32 %v106, %v107
      %v109 = vrot.slane %v108, 2
      %v110 = vadd.f32 %v108, %v109
      %v111 = vrot.slane %v110, 1
      %v112 = vadd.f32 %v110, %v111
      %s113 = vtos %v112
      %v114 = vld [vmem:[#allocation5] sm:$0xff]
      %v115 = vsel %vm90, %v114, 0.0
      %v116 = vsel %vm52, %v115, 0.0
      %117 = vadd.xlane.f32.xlu0 %v116
      %v118 = vpop.xlane.xlu0 %117
      %v119 = vrot.slane %v118, 4
      %v120 = vadd.f32 %v118, %v119
      %v121 = vrot.slane %v120, 2
      %v122 = vadd.f32 %v120, %v121
      %v123 = vrot.slane %v122, 1
      %v124 = vadd.f32 %v122, %v123
      %s125 = vtos %v124
      %vm126 = vcmp.eq.s32.totalorder %v26, 0
      %vm127 = vcmp.eq.s32.totalorder %v26, 1
      %vm128 = vcmp.eq.s32.totalorder %v26, 2
      %v129 = vstv %s125
      %v130 = vsel %vm128, %v129, 0.0
      %v131 = vstv %s113
      %v132 = vsel %vm127, %v131, %v130
      %v133 = vstv %s101
      %v134 = vsel %vm126, %v133, %v132
      %135 = vst [vmem:[#allocation6] sm:$0x1] %v134
    $region17: #{tpu_custom_call.1} parent=1 // pred_fallthru
      _
    // Predicated region
    $region18: #{tpu_custom_call.1} parent=1 // pred_check
      _
    $region19: #{tpu_custom_call.1} parent=1 // pred_check_branch
      %137 = sbr.rel (0) target = $region21
    $region20: #{tpu_custom_call.1} parent=1 // pred_region
      %s139 = ssub.s32 16, 16
      %140 = vsyncadd [#allocation7], %s139
      %s142 = sshll.u32 [#allocation6], 4
      %s143 = int_to_ptr.vmem [resolvable:$true] %s142
      %145 = dma.vmem_to_hbm [thread:$0]  %s143, 16, %s2, [#allocation7]
    $region21: #{tpu_custom_call.1} parent=1 // pred_fallthru
      _
    // Predicated region
    $region22: #{tpu_custom_call.1} parent=1 // pred_check
      _
    $region23: #{tpu_custom_call.1} parent=1 // pred_check_branch
      %147 = sbr.rel (0) target = $region25
    $region24: #{tpu_custom_call.1} parent=1 // pred_region
      %148 = dma.done [#allocation7], 16
    $region25: #{tpu_custom_call.1} parent=1 // pred_fallthru
      _
    %149 = vsyncpa [#allocation7], 1

</llo_original>
